<compile_context>
chip_gen: v5e
topology: v5e:2x2
jax: 0.10.0
libtpu: 0.0.40
codegen_flags: <defaults>
</compile_context>

<pallas_src>
import jax
import jax.numpy as jnp
from jax.experimental import pallas as pl
from jax.experimental.pallas import tpu as pltpu

_NEG_SLOPE = 0.01  # PyTorch nn.LeakyReLU default


def _central_disc_kernel(x_ref, w1_ref, b1_ref, w2_ref, b2_ref,
                         w3_ref, b3_ref, w4_ref, b4_ref, out_ref):
    """Fused MLP forward for one batch tile.

    x_ref:  (TB, Dp)         flattened (zero-padded) inputs for this batch tile
    wN_ref: (inN, outN)      layer weights, input-major (y = x @ W + b)
    bN_ref: (1, outN)        layer biases
    out_ref:(TB, 128)        sigmoid(logits); only column 0 is meaningful
    """
    def leaky_relu(h):
        return jnp.where(h > 0, h, _NEG_SLOPE * h)

    x = x_ref[...]

    h = jnp.dot(x, w1_ref[...], preferred_element_type=jnp.float32) + b1_ref[...]
    h = leaky_relu(h)                      # Dropout(0.1) -> identity in eval mode

    h = jnp.dot(h, w2_ref[...], preferred_element_type=jnp.float32) + b2_ref[...]
    h = leaky_relu(h)

    h = jnp.dot(h, w3_ref[...], preferred_element_type=jnp.float32) + b3_ref[...]
    h = leaky_relu(h)

    y = jnp.dot(h, w4_ref[...], preferred_element_type=jnp.float32) + b4_ref[...]
    out_ref[...] = jax.nn.sigmoid(y).astype(out_ref.dtype)


def _round_up(n, m):
    return ((n + m - 1) // m) * m


def central_discriminator_forward(x, params):
    """x: (B, n_vars, n_steps) float32 -> (B, 1) float32."""
    B = x.shape[0]
    x2 = x.reshape(B, -1).astype(jnp.float32)            # (B, D)
    D = x2.shape[1]

    w1, b1 = params["w1"].astype(jnp.float32), params["b1"].astype(jnp.float32)
    w2, b2 = params["w2"].astype(jnp.float32), params["b2"].astype(jnp.float32)
    w3, b3 = params["w3"].astype(jnp.float32), params["b3"].astype(jnp.float32)
    w4, b4 = params["w4"].astype(jnp.float32), params["b4"].astype(jnp.float32)

    H1, H2, H3 = w1.shape[1], w2.shape[1], w3.shape[1]    # 256, 128, 64

    LANE = 128
    Dp  = _round_up(D, LANE)                               # lane-dense contraction dim
    H3p = _round_up(H3, LANE)                              # lane-dense hidden 3
    OUTp = LANE                                            # lane-dense output slab

    # --- zero-pad operands so every matmul / store is lane-dense (exact) ---
    x2 = jnp.pad(x2, ((0, 0), (0, Dp - D)))                # (B, Dp)
    w1_p = jnp.pad(w1, ((0, Dp - D), (0, 0)))              # (Dp, H1)
    w3_p = jnp.pad(w3, ((0, 0), (0, H3p - H3)))            # (H2, H3p)
    b3_p = jnp.pad(b3, ((0, H3p - H3),)).reshape(1, H3p)
    w4_p = jnp.pad(w4, ((0, H3p - w4.shape[0]), (0, OUTp - w4.shape[1])))   # (H3p, OUTp)
    b4_p = jnp.pad(b4, ((0, OUTp - b4.shape[0]),)).reshape(1, OUTp)

    b1_2d = b1.reshape(1, H1)
    b2_2d = b2.reshape(1, H2)

    # --- batch padding / tiling ---
    Bp = max(8, _round_up(B, 8))
    tb = min(Bp, 512)                                      # big tile: amortize per-step cost
    Bp = _round_up(Bp, tb)
    x_pad = jnp.pad(x2, ((0, Bp - B), (0, 0)))             # (Bp, Dp)

    const = lambda i: (0, 0)

    out_pad = pl.pallas_call(
        _central_disc_kernel,
        out_shape=jax.ShapeDtypeStruct((Bp, OUTp), jnp.float32),
        grid_spec=pltpu.PrefetchScalarGridSpec(
            num_scalar_prefetch=0,
            grid=(Bp // tb,),
            in_specs=[
                pl.BlockSpec((tb, Dp), lambda i: (i, 0)),        # x tile
                pl.BlockSpec((Dp, H1), const),                   # W1 (row-padded)
                pl.BlockSpec((1, H1), const),                    # b1
                pl.BlockSpec((H1, H2), const),                   # W2
                pl.BlockSpec((1, H2), const),                    # b2
                pl.BlockSpec((H2, H3p), const),                  # W3 (col-padded)
                pl.BlockSpec((1, H3p), const),                   # b3 (padded)
                pl.BlockSpec((H3p, OUTp), const),                # W4 (padded)
                pl.BlockSpec((1, OUTp), const),                  # b4 (padded)
            ],
            out_specs=pl.BlockSpec((tb, OUTp), lambda i: (i, 0)),
        ),
        compiler_params=pltpu.CompilerParams(
            dimension_semantics=("parallel",)),                  # independent batch tiles
    )(x_pad, w1_p, b1_2d, w2, b2_2d, w3_p, b3_p, w4_p, b4_p)

    return out_pad[:B, :1]                                       # (B, 1)


def central_discriminator_reference(x, params):
    """Pure-JAX reference matching the PyTorch module in eval mode."""
    B = x.shape[0]
    h = x.reshape(B, -1).astype(jnp.float32)
    for li in range(1, 4):
        h = h @ params[f"w{li}"] + params[f"b{li}"]
        h = jnp.where(h > 0, h, _NEG_SLOPE * h)
    y = h @ params["w4"] + params["b4"]
    return jax.nn.sigmoid(y)


def init_params(key, n_vars, n_steps):
    """Deterministic params, PyTorch-style uniform(-1/sqrt(fan_in), +1/sqrt(fan_in)).
    Weights stored input-major (in, out) so the kernel computes x @ W directly."""
    dims = [n_vars * n_steps, 256, 128, 64, 1]
    ks = jax.random.split(key, 8)
    params = {}
    for li in range(4):
        fan_in = dims[li]
        s = 1.0 / float(fan_in) ** 0.5
        params[f"w{li + 1}"] = jax.random.uniform(
            ks[2 * li], (dims[li], dims[li + 1]), jnp.float32, -s, s)
        params[f"b{li + 1}"] = jax.random.uniform(
            ks[2 * li + 1], (dims[li + 1],), jnp.float32, -s, s)
    return params


if __name__ == "__main__":
    B, n_vars, n_steps = 2, 4, 16

    key = jax.random.PRNGKey(0)
    k_x, k_p = jax.random.split(key)
    x = jax.random.normal(k_x, (B, n_vars, n_steps), jnp.float32)
    params = init_params(k_p, n_vars, n_steps)

    out = jax.block_until_ready(central_discriminator_forward(x, params))
    ref = jax.block_until_ready(central_discriminator_reference(x, params))

    assert out.shape == (B, 1), out.shape
    assert jnp.allclose(out, ref, atol=1e-5, rtol=1e-5), \
        float(jnp.max(jnp.abs(out - ref)))

    print("KERNEL_OK")
</pallas_src>

<mosaic_0001>
module attributes {stable_mosaic.version = 11 : i64} {
  func.func @_central_disc_kernel(%arg0: i32, %arg1: memref<8x128xf32, #tpu.memory_space<vmem>>, %arg2: memref<128x256xf32, #tpu.memory_space<vmem>>, %arg3: memref<1x256xf32, #tpu.memory_space<vmem>>, %arg4: memref<256x128xf32, #tpu.memory_space<vmem>>, %arg5: memref<1x128xf32, #tpu.memory_space<vmem>>, %arg6: memref<128x128xf32, #tpu.memory_space<vmem>>, %arg7: memref<1x128xf32, #tpu.memory_space<vmem>>, %arg8: memref<128x128xf32, #tpu.memory_space<vmem>>, %arg9: memref<1x128xf32, #tpu.memory_space<vmem>>, %arg10: memref<8x128xf32, #tpu.memory_space<vmem>>) attributes {dimension_semantics = [#tpu.dimension_semantics<parallel>], iteration_bounds = array<i64: 1>, scalar_prefetch = 0 : i64, scratch_operands = 0 : i64, tpu.core_type = #tpu.core_type<tc>, window_params = [{transform_indices = @transform_0, window_bounds = array<i64: 8, 128>}, {pipeline_mode = #tpu.pipeline_mode<synchronous>, transform_indices = @transform_1, window_bounds = array<i64: 128, 256>}, {pipeline_mode = #tpu.pipeline_mode<synchronous>, transform_indices = @transform_2, window_bounds = array<i64: 1, 256>}, {pipeline_mode = #tpu.pipeline_mode<synchronous>, transform_indices = @transform_3, window_bounds = array<i64: 256, 128>}, {pipeline_mode = #tpu.pipeline_mode<synchronous>, transform_indices = @transform_4, window_bounds = array<i64: 1, 128>}, {pipeline_mode = #tpu.pipeline_mode<synchronous>, transform_indices = @transform_5, window_bounds = array<i64: 128, 128>}, {pipeline_mode = #tpu.pipeline_mode<synchronous>, transform_indices = @transform_6, window_bounds = array<i64: 1, 128>}, {pipeline_mode = #tpu.pipeline_mode<synchronous>, transform_indices = @transform_7, window_bounds = array<i64: 128, 128>}, {pipeline_mode = #tpu.pipeline_mode<synchronous>, transform_indices = @transform_8, window_bounds = array<i64: 1, 128>}, {transform_indices = @transform_9, window_bounds = array<i64: 8, 128>}]} {
    %c0 = arith.constant 0 : index
    %c0_0 = arith.constant 0 : index
    %0 = vector.load %arg1[%c0, %c0_0] : memref<8x128xf32, #tpu.memory_space<vmem>>, vector<8x128xf32>
    %c0_1 = arith.constant 0 : index
    %c0_2 = arith.constant 0 : index
    %1 = vector.load %arg2[%c0_1, %c0_2] : memref<128x256xf32, #tpu.memory_space<vmem>>, vector<128x256xf32>
    %cst = arith.constant dense<0.000000e+00> : vector<8x256xf32>
    %2 = tpu.matmul %0, %1, %cst {dimension_numbers = #tpu.dot_dimension_numbers<[1], [0], [0], [1], [0, 0, 1, 1], [], []>} : vector<8x128xf32>, vector<128x256xf32>, vector<8x256xf32> -> vector<8x256xf32>
    %c0_3 = arith.constant 0 : index
    %c0_4 = arith.constant 0 : index
    %3 = vector.load %arg3[%c0_3, %c0_4] : memref<1x256xf32, #tpu.memory_space<vmem>>, vector<1x256xf32>
    %4 = vector.broadcast %3 : vector<1x256xf32> to vector<8x256xf32>
    %5 = arith.addf %2, %4 : vector<8x256xf32>
    %cst_5 = arith.constant 0.000000e+00 : f32
    %6 = vector.broadcast %cst_5 : f32 to vector<8x256xf32>
    %7 = arith.cmpf ogt, %5, %6 : vector<8x256xf32>
    %cst_6 = arith.constant 0.00999999977 : f32
    %8 = vector.broadcast %cst_6 : f32 to vector<8x256xf32>
    %9 = arith.mulf %8, %5 : vector<8x256xf32>
    %10 = arith.select %7, %5, %9 : vector<8x256xi1>, vector<8x256xf32>
    %c0_7 = arith.constant 0 : index
    %c0_8 = arith.constant 0 : index
    %11 = vector.load %arg4[%c0_7, %c0_8] : memref<256x128xf32, #tpu.memory_space<vmem>>, vector<256x128xf32>
    %cst_9 = arith.constant dense<0.000000e+00> : vector<8x128xf32>
    %12 = tpu.matmul %10, %11, %cst_9 {dimension_numbers = #tpu.dot_dimension_numbers<[1], [0], [0], [1], [0, 0, 1, 1], [], []>} : vector<8x256xf32>, vector<256x128xf32>, vector<8x128xf32> -> vector<8x128xf32>
    %c0_10 = arith.constant 0 : index
    %c0_11 = arith.constant 0 : index
    %13 = vector.load %arg5[%c0_10, %c0_11] : memref<1x128xf32, #tpu.memory_space<vmem>>, vector<1x128xf32>
    %14 = vector.broadcast %13 : vector<1x128xf32> to vector<8x128xf32>
    %15 = arith.addf %12, %14 : vector<8x128xf32>
    %cst_12 = arith.constant 0.000000e+00 : f32
    %16 = vector.broadcast %cst_12 : f32 to vector<8x128xf32>
    %17 = arith.cmpf ogt, %15, %16 : vector<8x128xf32>
    %cst_13 = arith.constant 0.00999999977 : f32
    %18 = vector.broadcast %cst_13 : f32 to vector<8x128xf32>
    %19 = arith.mulf %18, %15 : vector<8x128xf32>
    %20 = arith.select %17, %15, %19 : vector<8x128xi1>, vector<8x128xf32>
    %c0_14 = arith.constant 0 : index
    %c0_15 = arith.constant 0 : index
    %21 = vector.load %arg6[%c0_14, %c0_15] : memref<128x128xf32, #tpu.memory_space<vmem>>, vector<128x128xf32>
    %cst_16 = arith.constant dense<0.000000e+00> : vector<8x128xf32>
    %22 = tpu.matmul %20, %21, %cst_16 {dimension_numbers = #tpu.dot_dimension_numbers<[1], [0], [0], [1], [0, 0, 1, 1], [], []>} : vector<8x128xf32>, vector<128x128xf32>, vector<8x128xf32> -> vector<8x128xf32>
    %c0_17 = arith.constant 0 : index
    %c0_18 = arith.constant 0 : index
    %23 = vector.load %arg7[%c0_17, %c0_18] : memref<1x128xf32, #tpu.memory_space<vmem>>, vector<1x128xf32>
    %24 = vector.broadcast %23 : vector<1x128xf32> to vector<8x128xf32>
    %25 = arith.addf %22, %24 : vector<8x128xf32>
    %cst_19 = arith.constant 0.000000e+00 : f32
    %26 = vector.broadcast %cst_19 : f32 to vector<8x128xf32>
    %27 = arith.cmpf ogt, %25, %26 : vector<8x128xf32>
    %cst_20 = arith.constant 0.00999999977 : f32
    %28 = vector.broadcast %cst_20 : f32 to vector<8x128xf32>
    %29 = arith.mulf %28, %25 : vector<8x128xf32>
    %30 = arith.select %27, %25, %29 : vector<8x128xi1>, vector<8x128xf32>
    %c0_21 = arith.constant 0 : index
    %c0_22 = arith.constant 0 : index
    %31 = vector.load %arg8[%c0_21, %c0_22] : memref<128x128xf32, #tpu.memory_space<vmem>>, vector<128x128xf32>
    %cst_23 = arith.constant dense<0.000000e+00> : vector<8x128xf32>
    %32 = tpu.matmul %30, %31, %cst_23 {dimension_numbers = #tpu.dot_dimension_numbers<[1], [0], [0], [1], [0, 0, 1, 1], [], []>} : vector<8x128xf32>, vector<128x128xf32>, vector<8x128xf32> -> vector<8x128xf32>
    %c0_24 = arith.constant 0 : index
    %c0_25 = arith.constant 0 : index
    %33 = vector.load %arg9[%c0_24, %c0_25] : memref<1x128xf32, #tpu.memory_space<vmem>>, vector<1x128xf32>
    %34 = vector.broadcast %33 : vector<1x128xf32> to vector<8x128xf32>
    %35 = arith.addf %32, %34 : vector<8x128xf32>
    %36 = arith.negf %35 : vector<8x128xf32>
    %37 = math.exp %36 : vector<8x128xf32>
    %cst_26 = arith.constant 1.000000e+00 : f32
    %38 = vector.broadcast %cst_26 : f32 to vector<8x128xf32>
    %39 = arith.addf %38, %37 : vector<8x128xf32>
    %40 = arith.divf %38, %39 : vector<8x128xf32>
    %c0_27 = arith.constant 0 : index
    %c0_28 = arith.constant 0 : index
    %41 = vector.load %arg10[%c0_27, %c0_28] : memref<8x128xf32, #tpu.memory_space<vmem>>, vector<8x128xf32>
    tpu.vector_store %arg10[%c0_27, %c0_28], %40 {strides = array<i32>} : memref<8x128xf32, #tpu.memory_space<vmem>>, vector<8x128xf32>,
    return
  }
  func.func @transform_0(%arg0: i32) -> (i32, i32) {
    %c0_i32 = arith.constant 0 : i32
    %c0_i32_0 = arith.constant 0 : i32
    return %arg0, %c0_i32 : i32, i32
  }
  func.func @transform_1(%arg0: i32) -> (i32, i32) {
    %c0_i32 = arith.constant 0 : i32
    %c0_i32_0 = arith.constant 0 : i32
    %c0_i32_1 = arith.constant 0 : i32
    return %c0_i32, %c0_i32_0 : i32, i32
  }
  func.func @transform_2(%arg0: i32) -> (i32, i32) {
    %c0_i32 = arith.constant 0 : i32
    %c0_i32_0 = arith.constant 0 : i32
    %c0_i32_1 = arith.constant 0 : i32
    return %c0_i32, %c0_i32_0 : i32, i32
  }
  func.func @transform_3(%arg0: i32) -> (i32, i32) {
    %c0_i32 = arith.constant 0 : i32
    %c0_i32_0 = arith.constant 0 : i32
    %c0_i32_1 = arith.constant 0 : i32
    return %c0_i32, %c0_i32_0 : i32, i32
  }
  func.func @transform_4(%arg0: i32) -> (i32, i32) {
    %c0_i32 = arith.constant 0 : i32
    %c0_i32_0 = arith.constant 0 : i32
    %c0_i32_1 = arith.constant 0 : i32
    return %c0_i32, %c0_i32_0 : i32, i32
  }
  func.func @transform_5(%arg0: i32) -> (i32, i32) {
    %c0_i32 = arith.constant 0 : i32
    %c0_i32_0 = arith.constant 0 : i32
    %c0_i32_1 = arith.constant 0 : i32
    return %c0_i32, %c0_i32_0 : i32, i32
  }
  func.func @transform_6(%arg0: i32) -> (i32, i32) {
    %c0_i32 = arith.constant 0 : i32
    %c0_i32_0 = arith.constant 0 : i32
    %c0_i32_1 = arith.constant 0 : i32
    return %c0_i32, %c0_i32_0 : i32, i32
  }
  func.func @transform_7(%arg0: i32) -> (i32, i32) {
    %c0_i32 = arith.constant 0 : i32
    %c0_i32_0 = arith.constant 0 : i32
    %c0_i32_1 = arith.constant 0 : i32
    return %c0_i32, %c0_i32_0 : i32, i32
  }
  func.func @transform_8(%arg0: i32) -> (i32, i32) {
    %c0_i32 = arith.constant 0 : i32
    %c0_i32_0 = arith.constant 0 : i32
    %c0_i32_1 = arith.constant 0 : i32
    return %c0_i32, %c0_i32_0 : i32, i32
  }
  func.func @transform_9(%arg0: i32) -> (i32, i32) {
    %c0_i32 = arith.constant 0 : i32
    %c0_i32_0 = arith.constant 0 : i32
    return %arg0, %c0_i32 : i32, i32
  }
}

</mosaic_0001>

<llo_original>
// kernel: tpu_custom_call.1
$region0: #{tpu_custom_call.1}
  #allocation0 [shape = 'u32[]', space=smem, size = 0x4, offset = 0x4, fixed_abs, tag = 'smem constant byte address 0x4 - core index']
  #allocation1 [shape = 'u32[72,128]{1,0:T(1,128)}', space=vmem, size = 0x9000, scoped, tag = 'internal scratch']
  %s0 = inlined_call_operand.hbm [shape: f32[8,128], index: 0, kind: input, shape index: {}]
  %s1 = inlined_call_operand.hbm [shape: f32[128,256], index: 1, kind: input, shape index: {}]
  %s2 = inlined_call_operand.hbm [shape: f32[1,256], index: 2, kind: input, shape index: {}]
  %s3 = inlined_call_operand.hbm [shape: f32[256,128], index: 3, kind: input, shape index: {}]
  %s4 = inlined_call_operand.vmem [shape: f32[1,128], index: 4, kind: input, shape index: {}]
  %s5 = inlined_call_operand.hbm [shape: f32[128,128], index: 5, kind: input, shape index: {}]
  %s6 = inlined_call_operand.vmem [shape: f32[1,128], index: 6, kind: input, shape index: {}]
  %s7 = inlined_call_operand.hbm [shape: f32[128,128], index: 7, kind: input, shape index: {}]
  %s8 = inlined_call_operand.vmem [shape: f32[1,128], index: 8, kind: input, shape index: {}]
  %s9 = inlined_call_operand.hbm [shape: f32[8,128], index: 9, kind: output, shape index: {}]
  %s10 = sld [smem:[#allocation0]]
  $region70: #{tpu_custom_call.1} parent=0
    _
  %s12 = ssub.s32 1, %s10
  %s13 = scalar_select 0, %s12, %s10
  $region1: #{tpu_custom_call.1} parent=0
    #allocation2 [shape = 'u8[4096]{0}', space=vmem, size = 0x1000, scoped, tag = 'input window, operand 0, single buffered']
    #allocation3 [shape = 's32[1]{0}', space=sflag, size = 0x4, scoped, tag = 'scoped memory for tpu_custom_call.1']
    #allocation4 [shape = 's32[1]{0}', space=sflag, size = 0x4, scoped, tag = 'scoped memory for tpu_custom_call.1']
    #allocation5 [shape = 'u8[131072]{0}', space=vmem, size = 0x20000, scoped, tag = 'input window, operand 1, single buffered']
    #allocation6 [shape = 's32[1]{0}', space=sflag, size = 0x4, scoped, tag = 'scoped memory for tpu_custom_call.1']
    #allocation7 [shape = 'u8[1024]{0}', space=vmem, size = 0x400, scoped, tag = 'input window, operand 2, single buffered']
    #allocation8 [shape = 'u8[131072]{0}', space=vmem, size = 0x20000, scoped, tag = 'input window, operand 3, single buffered']
    #allocation9 [shape = 's32[1]{0}', space=sflag, size = 0x4, scoped, tag = 'scoped memory for tpu_custom_call.1']
    #allocation10 [shape = 'u8[65536]{0}', space=vmem, size = 0x10000, scoped, tag = 'input window, operand 5, single buffered']
    #allocation11 [shape = 'u8[65536]{0}', space=vmem, size = 0x10000, scoped, tag = 'input window, operand 7, single buffered']
    #allocation12 [shape = 's32[1]{0}', space=sflag, size = 0x4, scoped, tag = 'scoped memory for tpu_custom_call.1']
    #allocation13 [shape = 'u8[4096]{0}', space=vmem, size = 0x1000, scoped, tag = 'output window, operand 0, single buffered']
    %14 = vsyncpa [#allocation3], 0
    %15 = vsyncpa [#allocation6], 0
    %16 = vsyncpa [#allocation9], 0
    %17 = vsyncpa [#allocation12], 0
    %18 = vsyncpa [#allocation4], 0
    // Predicated region
    $region2: #{tpu_custom_call.1} parent=1 // pred_check
      _
    $region3: #{tpu_custom_call.1} parent=1 // pred_check_branch
      %20 = sbr.rel (0) target = $region5
    $region4: #{tpu_custom_call.1} parent=1 // pred_region
      %22 = vsyncadd [#allocation3], 0
      %s24 = sshll.u32 %s0, 4
      %s25 = int_to_ptr.hbm [resolvable:$true] %s24
      %s26 = sshll.u32 [#allocation2], 4
      %s27 = int_to_ptr.vmem [resolvable:$true] %s26
      %29 = dma.hbm_to_vmem [thread:$0]  %s25, 128, %s27, [#allocation3]
    $region5: #{tpu_custom_call.1} parent=1 // pred_fallthru
      _
    // Predicated region
    $region6: #{tpu_custom_call.1} parent=1 // pred_check
      _
    $region7: #{tpu_custom_call.1} parent=1 // pred_check_branch
      %31 = sbr.rel (0) target = $region9
    $region8: #{tpu_custom_call.1} parent=1 // pred_region
      %33 = vsyncadd [#allocation6], 0
      %s34 = sshll.u32 %s1, 4
      %s35 = int_to_ptr.hbm [resolvable:$true] %s34
      %s36 = sshll.u32 [#allocation5], 4
      %s37 = int_to_ptr.vmem [resolvable:$true] %s36
      %42 = dma.hbm_to_vmem [thread:$0]  %s35, 4096, %s37, [#allocation6], 256, 256, 16
    $region9: #{tpu_custom_call.1} parent=1 // pred_fallthru
      _
    // Predicated region
    $region10: #{tpu_custom_call.1} parent=1 // pred_check
      _
    $region11: #{tpu_custom_call.1} parent=1 // pred_check_branch
      %44 = sbr.rel (0) target = $region13
    $region12: #{tpu_custom_call.1} parent=1 // pred_region
      %46 = vsyncadd [#allocation6], 0
      %s48 = sshll.u32 %s2, 4
      %s49 = int_to_ptr.hbm [resolvable:$true] %s48
      %s50 = sshll.u32 [#allocation7], 4
      %s51 = int_to_ptr.vmem [resolvable:$true] %s50
      %53 = dma.hbm_to_vmem [thread:$0]  %s49, 32, %s51, [#allocation6]
    $region13: #{tpu_custom_call.1} parent=1 // pred_fallthru
      _
    // Predicated region
    $region14: #{tpu_custom_call.1} parent=1 // pred_check
      _
    $region15: #{tpu_custom_call.1} parent=1 // pred_check_branch
      %55 = sbr.rel (0) target = $region17
    $region16: #{tpu_custom_call.1} parent=1 // pred_region
      %57 = vsyncadd [#allocation9], 0
      %s58 = sshll.u32 %s3, 4
      %s59 = int_to_ptr.hbm [resolvable:$true] %s58
      %s60 = sshll.u32 [#allocation8], 4
      %s61 = int_to_ptr.vmem [resolvable:$true] %s60
      %66 = dma.hbm_to_vmem [thread:$0]  %s59, 4096, %s61, [#allocation9], 128, 128, 8
    $region17: #{tpu_custom_call.1} parent=1 // pred_fallthru
      _
    // Predicated region
    $region18: #{tpu_custom_call.1} parent=1 // pred_check
      _
    $region19: #{tpu_custom_call.1} parent=1 // pred_check_branch
      %68 = sbr.rel (0) target = $region21
    $region20: #{tpu_custom_call.1} parent=1 // pred_region
      _
    $region21: #{tpu_custom_call.1} parent=1 // pred_fallthru
      _
    // Predicated region
    $region22: #{tpu_custom_call.1} parent=1 // pred_check
      _
    $region23: #{tpu_custom_call.1} parent=1 // pred_check_branch
      %70 = sbr.rel (0) target = $region25
    $region24: #{tpu_custom_call.1} parent=1 // pred_region
      %72 = vsyncadd [#allocation9], 0
      %s73 = sshll.u32 %s5, 4
      %s74 = int_to_ptr.hbm [resolvable:$true] %s73
      %s75 = sshll.u32 [#allocation10], 4
      %s76 = int_to_ptr.vmem [resolvable:$true] %s75
      %81 = dma.hbm_to_vmem [thread:$0]  %s74, 2048, %s76, [#allocation9], 128, 128, 8
    $region25: #{tpu_custom_call.1} parent=1 // pred_fallthru
      _
    // Predicated region
    $region26: #{tpu_custom_call.1} parent=1 // pred_check
      _
    $region27: #{tpu_custom_call.1} parent=1 // pred_check_branch
      %83 = sbr.rel (0) target = $region29
    $region28: #{tpu_custom_call.1} parent=1 // pred_region
      _
    $region29: #{tpu_custom_call.1} parent=1 // pred_fallthru
      _
    // Predicated region
    $region30: #{tpu_custom_call.1} parent=1 // pred_check
      _
    $region31: #{tpu_custom_call.1} parent=1 // pred_check_branch
      %85 = sbr.rel (0) target = $region33
    $region32: #{tpu_custom_call.1} parent=1 // pred_region
      %87 = vsyncadd [#allocation12], 0
      %s88 = sshll.u32 %s7, 4
      %s89 = int_to_ptr.hbm [resolvable:$true] %s88
      %s90 = sshll.u32 [#allocation11], 4
      %s91 = int_to_ptr.vmem [resolvable:$true] %s90
      %96 = dma.hbm_to_vmem [thread:$0]  %s89, 2048, %s91, [#allocation12], 128, 128, 8
    $region33: #{tpu_custom_call.1} parent=1 // pred_fallthru
      _
    // Predicated region
    $region34: #{tpu_custom_call.1} parent=1 // pred_check
      _
    $region35: #{tpu_custom_call.1} parent=1 // pred_check_branch
      %98 = sbr.rel (0) target = $region37
    $region36: #{tpu_custom_call.1} parent=1 // pred_region
      _
    $region37: #{tpu_custom_call.1} parent=1 // pred_fallthru
      _
    // Predicated region
    $region38: #{tpu_custom_call.1} parent=1 // pred_check
      _
    $region39: #{tpu_custom_call.1} parent=1 // pred_check_branch
      %100 = sbr.rel (0) target = $region41
    $region40: #{tpu_custom_call.1} parent=1 // pred_region
      %102 = dma.done [#allocation3], 128
    $region41: #{tpu_custom_call.1} parent=1 // pred_fallthru
      _
    // Predicated region
    $region42: #{tpu_custom_call.1} parent=1 // pred_check
      _
    $region43: #{tpu_custom_call.1} parent=1 // pred_check_branch
      %104 = sbr.rel (0) target = $region45
    $region44: #{tpu_custom_call.1} parent=1 // pred_region
      %106 = dma.done [#allocation6], 4096
    $region45: #{tpu_custom_call.1} parent=1 // pred_fallthru
      _
    // Predicated region
    $region46: #{tpu_custom_call.1} parent=1 // pred_check
      _
    $region47: #{tpu_custom_call.1} parent=1 // pred_check_branch
      %108 = sbr.rel (0) target = $region49
    $region48: #{tpu_custom_call.1} parent=1 // pred_region
      %110 = dma.done [#allocation6], 32
    $region49: #{tpu_custom_call.1} parent=1 // pred_fallthru
      _
    // Predicated region
    $region50: #{tpu_custom_call.1} parent=1 // pred_check
      _
    $region51: #{tpu_custom_call.1} parent=1 // pred_check_branch
      %112 = sbr.rel (0) target = $region53
    $region52: #{tpu_custom_call.1} parent=1 // pred_region
      %114 = dma.done [#allocation9], 4096
    $region53: #{tpu_custom_call.1} parent=1 // pred_fallthru
      _
    // Predicated region
    $region54: #{tpu_custom_call.1} parent=1 // pred_check
      _
    $region55: #{tpu_custom_call.1} parent=1 // pred_check_branch
      %116 = sbr.rel (0) target = $region57
    $region56: #{tpu_custom_call.1} parent=1 // pred_region
      %118 = dma.done [#allocation9], 2048
    $region57: #{tpu_custom_call.1} parent=1 // pred_fallthru
      _
    // Predicated region
    $region58: #{tpu_custom_call.1} parent=1 // pred_check
      _
    $region59: #{tpu_custom_call.1} parent=1 // pred_check_branch
      %120 = sbr.rel (0) target = $region61
    $region60: #{tpu_custom_call.1} parent=1 // pred_region
      %122 = dma.done [#allocation12], 2048
    $region61: #{tpu_custom_call.1} parent=1 // pred_fallthru
      _
    %v123 = vld [vmem:[#allocation2] sm:$0xff]
    %v124 = vld [vmem:[#allocation5] sm:$0xff]
    %v125 = vld [vmem:[#allocation5 + $0x8] sm:$0xff]
    %v126 = vld [vmem:[#allocation5 + $0x10] sm:$0xff]
    %v127 = vld [vmem:[#allocation5 + $0x18] sm:$0xff]
    %v128 = vld [vmem:[#allocation5 + $0x20] sm:$0xff]
    %v129 = vld [vmem:[#allocation5 + $0x28] sm:$0xff]
    %v130 = vld [vmem:[#allocation5 + $0x30] sm:$0xff]
    %v131 = vld [vmem:[#allocation5 + $0x38] sm:$0xff]
    %v132 = vld [vmem:[#allocation5 + $0x40] sm:$0xff]
    %v133 = vld [vmem:[#allocation5 + $0x48] sm:$0xff]
    %v134 = vld [vmem:[#allocation5 + $0x50] sm:$0xff]
    %v135 = vld [vmem:[#allocation5 + $0x58] sm:$0xff]
    %v136 = vld [vmem:[#allocation5 + $0x60] sm:$0xff]
    %v137 = vld [vmem:[#allocation5 + $0x68] sm:$0xff]
    %v138 = vld [vmem:[#allocation5 + $0x70] sm:$0xff]
    %v139 = vld [vmem:[#allocation5 + $0x78] sm:$0xff]
    %v140 = vld [vmem:[#allocation5 + $0x80] sm:$0xff]
    %v141 = vld [vmem:[#allocation5 + $0x88] sm:$0xff]
    %v142 = vld [vmem:[#allocation5 + $0x90] sm:$0xff]
    %v143 = vld [vmem:[#allocation5 + $0x98] sm:$0xff]
    %v144 = vld [vmem:[#allocation5 + $0xa0] sm:$0xff]
    %v145 = vld [vmem:[#allocation5 + $0xa8] sm:$0xff]
    %v146 = vld [vmem:[#allocation5 + $0xb0] sm:$0xff]
    %v147 = vld [vmem:[#allocation5 + $0xb8] sm:$0xff]
    %v148 = vld [vmem:[#allocation5 + $0xc0] sm:$0xff]
    %v149 = vld [vmem:[#allocation5 + $0xc8] sm:$0xff]
    %v150 = vld [vmem:[#allocation5 + $0xd0] sm:$0xff]
    %v151 = vld [vmem:[#allocation5 + $0xd8] sm:$0xff]
    %v152 = vld [vmem:[#allocation5 + $0xe0] sm:$0xff]
    %v153 = vld [vmem:[#allocation5 + $0xe8] sm:$0xff]
    %v154 = vld [vmem:[#allocation5 + $0xf0] sm:$0xff]
    %v155 = vld [vmem:[#allocation5 + $0xf8] sm:$0xff]
    %v156 = vld [vmem:[#allocation7] sm:$0x3]
    %v158 = vperm.slane %v156, 0
    %v159 = vperm.slane %v156, 1
    %162 = vmatpush.msra.mxu0 %v154
    %163 = vmatpush.msra.mxu0 %v152
    %164 = vmatpush.msra.mxu0 %v150
    %165 = vmatpush.msra.mxu0 %v148
    %166 = vmatpush.msra.mxu0 %v146
    %167 = vmatpush.msra.mxu0 %v144
    %168 = vmatpush.msra.mxu0 %v142
    %169 = vmatpush.msra.mxu0 %v140
    %170 = vmatpush.msra.mxu0 %v138
    %171 = vmatpush.msra.mxu0 %v136
    %172 = vmatpush.msra.mxu0 %v134
    %173 = vmatpush.msra.mxu0 %v132
    %174 = vmatpush.msra.mxu0 %v130
    %175 = vmatpush.msra.mxu0 %v128
    %176 = vmatpush.msra.mxu0 %v126
    %177 = vmatpush.msra.mxu0 %v124
    %178 = vmatmul.f32.gmra.mxu0 %v123
    %v179 = vpop.f32.mrf.mxu0
    %v180 = vadd.f32 %v158, %v179
    %181 = vdwg.mxu0
    %182 = vmatpush.msra.mxu0 %v155
    %183 = vmatpush.msra.mxu0 %v153
    %184 = vmatpush.msra.mxu0 %v151
    %185 = vmatpush.msra.mxu0 %v149
    %186 = vmatpush.msra.mxu0 %v147
    %187 = vmatpush.msra.mxu0 %v145
    %188 = vmatpush.msra.mxu0 %v143
    %189 = vmatpush.msra.mxu0 %v141
    %190 = vmatpush.msra.mxu0 %v139
    %191 = vmatpush.msra.mxu0 %v137
    %192 = vmatpush.msra.mxu0 %v135
    %193 = vmatpush.msra.mxu0 %v133
    %194 = vmatpush.msra.mxu0 %v131
    %195 = vmatpush.msra.mxu0 %v129
    %196 = vmatpush.msra.mxu0 %v127
    %197 = vmatpush.msra.mxu0 %v125
    %198 = vmatmul.f32.gmra.mxu0 %v123
    %v199 = vpop.f32.mrf.mxu0
    %v200 = vadd.f32 %v159, %v199
    %201 = vdwg.mxu0
    %vm202 = vcmp.gt.f32.partialorder %v180, 0.0
    %vm203 = vcmp.gt.f32.partialorder %v200, 0.0
    %v204 = vmul.f32 %v180, 0.01
    %v205 = vmul.f32 %v200, 0.01
    %v206 = vsel %vm202, %v180, %v204
    %v207 = vsel %vm203, %v200, %v205
    %v208 = vld [vmem:[#allocation8] sm:$0xff]
    %v209 = vld [vmem:[#allocation8 + $0x8] sm:$0xff]
    %v210 = vld [vmem:[#allocation8 + $0x10] sm:$0xff]
    %v211 = vld [vmem:[#allocation8 + $0x18] sm:$0xff]
    %v212 = vld [vmem:[#allocation8 + $0x20] sm:$0xff]
    %v213 = vld [vmem:[#allocation8 + $0x28] sm:$0xff]
    %v214 = vld [vmem:[#allocation8 + $0x30] sm:$0xff]
    %v215 = vld [vmem:[#allocation8 + $0x38] sm:$0xff]
    %v216 = vld [vmem:[#allocation8 + $0x40] sm:$0xff]
    %v217 = vld [vmem:[#allocation8 + $0x48] sm:$0xff]
    %v218 = vld [vmem:[#allocation8 + $0x50] sm:$0xff]
    %v219 = vld [vmem:[#allocation8 + $0x58] sm:$0xff]
    %v220 = vld [vmem:[#allocation8 + $0x60] sm:$0xff]
    %v221 = vld [vmem:[#allocation8 + $0x68] sm:$0xff]
    %v222 = vld [vmem:[#allocation8 + $0x70] sm:$0xff]
    %v223 = vld [vmem:[#allocation8 + $0x78] sm:$0xff]
    %v224 = vld [vmem:[#allocation8 + $0x80] sm:$0xff]
    %v225 = vld [vmem:[#allocation8 + $0x88] sm:$0xff]
    %v226 = vld [vmem:[#allocation8 + $0x90] sm:$0xff]
    %v227 = vld [vmem:[#allocation8 + $0x98] sm:$0xff]
    %v228 = vld [vmem:[#allocation8 + $0xa0] sm:$0xff]
    %v229 = vld [vmem:[#allocation8 + $0xa8] sm:$0xff]
    %v230 = vld [vmem:[#allocation8 + $0xb0] sm:$0xff]
    %v231 = vld [vmem:[#allocation8 + $0xb8] sm:$0xff]
    %v232 = vld [vmem:[#allocation8 + $0xc0] sm:$0xff]
    %v233 = vld [vmem:[#allocation8 + $0xc8] sm:$0xff]
    %v234 = vld [vmem:[#allocation8 + $0xd0] sm:$0xff]
    %v235 = vld [vmem:[#allocation8 + $0xd8] sm:$0xff]
    %v236 = vld [vmem:[#allocation8 + $0xe0] sm:$0xff]
    %v237 = vld [vmem:[#allocation8 + $0xe8] sm:$0xff]
    %v238 = vld [vmem:[#allocation8 + $0xf0] sm:$0xff]
    %v239 = vld [vmem:[#allocation8 + $0xf8] sm:$0xff]
    %v240 = vld [vmem:[%s4] sm:$0x1]
    %v242 = vperm.slane %v240, 0
    %244 = vmatpush.msra.mxu0 %v223
    %245 = vmatpush.msra.mxu0 %v222
    %246 = vmatpush.msra.mxu0 %v221
    %247 = vmatpush.msra.mxu0 %v220
    %248 = vmatpush.msra.mxu0 %v219
    %249 = vmatpush.msra.mxu0 %v218
    %250 = vmatpush.msra.mxu0 %v217
    %251 = vmatpush.msra.mxu0 %v216
    %252 = vmatpush.msra.mxu0 %v215
    %253 = vmatpush.msra.mxu0 %v214
    %254 = vmatpush.msra.mxu0 %v213
    %255 = vmatpush.msra.mxu0 %v212
    %256 = vmatpush.msra.mxu0 %v211
    %257 = vmatpush.msra.mxu0 %v210
    %258 = vmatpush.msra.mxu0 %v209
    %259 = vmatpush.msra.mxu0 %v208
    %260 = vmatmul.f32.gmra.mxu0 %v206
    %v261 = vpop.f32.mrf.mxu0
    %v262 = vadd.f32 %v242, %v261
    %263 = vdwg.mxu0
    %264 = vmatpush.msra.mxu0 %v239
    %265 = vmatpush.msra.mxu0 %v238
    %266 = vmatpush.msra.mxu0 %v237
    %267 = vmatpush.msra.mxu0 %v236
    %268 = vmatpush.msra.mxu0 %v235
    %269 = vmatpush.msra.mxu0 %v234
    %270 = vmatpush.msra.mxu0 %v233
    %271 = vmatpush.msra.mxu0 %v232
    %272 = vmatpush.msra.mxu0 %v231
    %273 = vmatpush.msra.mxu0 %v230
    %274 = vmatpush.msra.mxu0 %v229
    %275 = vmatpush.msra.mxu0 %v228
    %276 = vmatpush.msra.mxu0 %v227
    %277 = vmatpush.msra.mxu0 %v226
    %278 = vmatpush.msra.mxu0 %v225
    %279 = vmatpush.msra.mxu0 %v224
    %280 = vmatmul.f32.gmra.mxu0 %v207
    %v281 = vpop.f32.mrf.mxu0
    %v282 = vadd.f32 %v262, %v281
    %283 = vdwg.mxu0
    %vm284 = vcmp.gt.f32.partialorder %v282, 0.0
    %v285 = vmul.f32 %v282, 0.01
    %v286 = vsel %vm284, %v282, %v285
    %v287 = vld [vmem:[#allocation10] sm:$0xff]
    %v288 = vld [vmem:[#allocation10 + $0x8] sm:$0xff]
    %v289 = vld [vmem:[#allocation10 + $0x10] sm:$0xff]
    %v290 = vld [vmem:[#allocation10 + $0x18] sm:$0xff]
    %v291 = vld [vmem:[#allocation10 + $0x20] sm:$0xff]
    %v292 = vld [vmem:[#allocation10 + $0x28] sm:$0xff]
    %v293 = vld [vmem:[#allocation10 + $0x30] sm:$0xff]
    %v294 = vld [vmem:[#allocation10 + $0x38] sm:$0xff]
    %v295 = vld [vmem:[#allocation10 + $0x40] sm:$0xff]
    %v296 = vld [vmem:[#allocation10 + $0x48] sm:$0xff]
    %v297 = vld [vmem:[#allocation10 + $0x50] sm:$0xff]
    %v298 = vld [vmem:[#allocation10 + $0x58] sm:$0xff]
    %v299 = vld [vmem:[#allocation10 + $0x60] sm:$0xff]
    %v300 = vld [vmem:[#allocation10 + $0x68] sm:$0xff]
    %v301 = vld [vmem:[#allocation10 + $0x70] sm:$0xff]
    %v302 = vld [vmem:[#allocation10 + $0x78] sm:$0xff]
    %v303 = vld [vmem:[%s6] sm:$0x1]
    %v305 = vperm.slane %v303, 0
    %307 = vmatpush.msra.mxu0 %v302
    %308 = vmatpush.msra.mxu0 %v301
    %309 = vmatpush.msra.mxu0 %v300
    %310 = vmatpush.msra.mxu0 %v299
    %311 = vmatpush.msra.mxu0 %v298
    %312 = vmatpush.msra.mxu0 %v297
    %313 = vmatpush.msra.mxu0 %v296
    %314 = vmatpush.msra.mxu0 %v295
    %315 = vmatpush.msra.mxu0 %v294
    %316 = vmatpush.msra.mxu0 %v293
    %317 = vmatpush.msra.mxu0 %v292
    %318 = vmatpush.msra.mxu0 %v291
    %319 = vmatpush.msra.mxu0 %v290
    %320 = vmatpush.msra.mxu0 %v289
    %321 = vmatpush.msra.mxu0 %v288
    %322 = vmatpush.msra.mxu0 %v287
    %323 = vmatmul.f32.gmra.mxu0 %v286
    %v324 = vpop.f32.mrf.mxu0
    %v325 = vadd.f32 %v305, %v324
    %326 = vdwg.mxu0
    %vm327 = vcmp.gt.f32.partialorder %v325, 0.0
    %v328 = vmul.f32 %v325, 0.01
    %v329 = vsel %vm327, %v325, %v328
    %v330 = vld [vmem:[#allocation11] sm:$0xff]
    %v331 = vld [vmem:[#allocation11 + $0x8] sm:$0xff]
    %v332 = vld [vmem:[#allocation11 + $0x10] sm:$0xff]
    %v333 = vld [vmem:[#allocation11 + $0x18] sm:$0xff]
    %v334 = vld [vmem:[#allocation11 + $0x20] sm:$0xff]
    %v335 = vld [vmem:[#allocation11 + $0x28] sm:$0xff]
    %v336 = vld [vmem:[#allocation11 + $0x30] sm:$0xff]
    %v337 = vld [vmem:[#allocation11 + $0x38] sm:$0xff]
    %v338 = vld [vmem:[#allocation11 + $0x40] sm:$0xff]
    %v339 = vld [vmem:[#allocation11 + $0x48] sm:$0xff]
    %v340 = vld [vmem:[#allocation11 + $0x50] sm:$0xff]
    %v341 = vld [vmem:[#allocation11 + $0x58] sm:$0xff]
    %v342 = vld [vmem:[#allocation11 + $0x60] sm:$0xff]
    %v343 = vld [vmem:[#allocation11 + $0x68] sm:$0xff]
    %v344 = vld [vmem:[#allocation11 + $0x70] sm:$0xff]
    %v345 = vld [vmem:[#allocation11 + $0x78] sm:$0xff]
    %v346 = vld [vmem:[%s8] sm:$0x1]
    %v348 = vperm.slane %v346, 0
    %350 = vmatpush.msra.mxu0 %v345
    %351 = vmatpush.msra.mxu0 %v344
    %352 = vmatpush.msra.mxu0 %v343
    %353 = vmatpush.msra.mxu0 %v342
    %354 = vmatpush.msra.mxu0 %v341
    %355 = vmatpush.msra.mxu0 %v340
    %356 = vmatpush.msra.mxu0 %v339
    %357 = vmatpush.msra.mxu0 %v338
    %358 = vmatpush.msra.mxu0 %v337
    %359 = vmatpush.msra.mxu0 %v336
    %360 = vmatpush.msra.mxu0 %v335
    %361 = vmatpush.msra.mxu0 %v334
    %362 = vmatpush.msra.mxu0 %v333
    %363 = vmatpush.msra.mxu0 %v332
    %364 = vmatpush.msra.mxu0 %v331
    %365 = vmatpush.msra.mxu0 %v330
    %366 = vmatmul.f32.gmra.mxu0 %v329
    %v367 = vpop.f32.mrf.mxu0
    %v368 = vadd.f32 %v348, %v367
    %369 = vdwg.mxu0
    %v370 = vxor.u32 %v368, 2147483648
    %v371 = vmul.f32 %v370, 1.442695
    %v372 = vpow.pop %v371
    %v373 = vadd.f32 %v372, 1.0
    %v374 = vrcp.pop %v373
    %v375 = vmul.f32 %v373, %v374
    %v376 = vsub.f32 1.0, %v375
    %v377 = vmul.f32 %v374, %v376
    %v378 = vadd.f32 %v374, %v377
    %vm379 = vweird.f32 %v373
    %vm380 = vweird.f32 %v374
    %vm381 = vmor %vm379, %vm380
    %v382 = vsel %vm381, %v374, %v378
    %v383 = vand.u32 2147483647, %v373
    %vm384 = vcmp.eq.f32.partialorder %v383, 8.507059e+37
    %v385 = vand.u32 %v373, 2147483648
    %v386 = vor.u32 1.1754944e-38, %v385
    %v387 = vsel %vm384, %v386, %v382
    %v388 = vmul.f32 1.0, %v387
    %389 = vst [vmem:[#allocation13] sm:$0xff] %v388
    // Predicated region
    $region62: #{tpu_custom_call.1} parent=1 // pred_check
      _
    $region63: #{tpu_custom_call.1} parent=1 // pred_check_branch
      %391 = sbr.rel (0) target = $region65
    $region64: #{tpu_custom_call.1} parent=1 // pred_region
      %393 = vsyncadd [#allocation4], 0
      %s395 = sshll.u32 [#allocation13], 4
      %s396 = int_to_ptr.vmem [resolvable:$true] %s395
      %s397 = sshll.u32 %s9, 4
      %s398 = int_to_ptr.hbm [resolvable:$true] %s397
      %400 = dma.vmem_to_hbm [thread:$0]  %s396, 128, %s398, [#allocation4]
    $region65: #{tpu_custom_call.1} parent=1 // pred_fallthru
      _
    // Predicated region
    $region66: #{tpu_custom_call.1} parent=1 // pred_check
      _
    $region67: #{tpu_custom_call.1} parent=1 // pred_check_branch
      %402 = sbr.rel (0) target = $region69
    $region68: #{tpu_custom_call.1} parent=1 // pred_region
      %404 = dma.done [#allocation4], 128
    $region69: #{tpu_custom_call.1} parent=1 // pred_fallthru
      _
    %405 = vsyncpa [#allocation3], 1
    %406 = vsyncpa [#allocation6], 1
    %407 = vsyncpa [#allocation9], 1
    %408 = vsyncpa [#allocation12], 1
    %409 = vsyncpa [#allocation4], 1

</llo_original>
